<compile_context>
chip_gen: v6e
topology: v6e:2x2x1
jax: 0.10.0
libtpu: 0.0.40
codegen_flags: <defaults>
</compile_context>

<pallas_src>
import functools

import numpy as np
import jax
import jax.numpy as jnp
from jax import lax
from jax.experimental import pallas as pl
from jax.experimental.pallas import tpu as pltpu


def _round_up(v, m):
    return (v + m - 1) // m * m


def _detect_vmem_capacity():
    try:
        info = pltpu.get_tpu_info()
        cap = int(getattr(info, "vmem_capacity_bytes"))
        if cap > 0:
            return cap
    except Exception:
        pass
    return 64 * 1024 * 1024   # conservative default (v7x-sized)


_VMEM_CAP = _detect_vmem_capacity()
_BIG_VMEM = _VMEM_CAP >= 100 * 1024 * 1024          # v5e / v6e (128 MiB)
_VMEM_LIMIT = (64 if _BIG_VMEM else 32) * 1024 * 1024


# ----------------------------------------------------------------------------
# Fused matmul kernel:
#   out = combine(act( (pre_relu(A*ps+ph) @ B) * scale + shift ), extra)
# ----------------------------------------------------------------------------

def _make_mm_kernel(pre, act, combine):
    def kernel(*refs):
        i = 0
        a_ref = refs[i]; i += 1
        b_ref = refs[i]; i += 1
        if pre:
            ps_ref = refs[i]; ph_ref = refs[i + 1]; i += 2
        s_ref = refs[i]; h_ref = refs[i + 1]; i += 2
        e_ref = None
        if combine != "none":
            e_ref = refs[i]; i += 1
        o_ref = refs[i]

        a = a_ref[...]
        if pre:
            # fused pre-activation: relu(bn1(x)) on the A operand (f32 math)
            a = a.astype(jnp.float32) * ps_ref[...] + ph_ref[...]
            a = jnp.maximum(a, 0.0).astype(jnp.bfloat16)
        y = jnp.dot(a, b_ref[...], preferred_element_type=jnp.float32)
        y = y * s_ref[...] + h_ref[...]
        if act == "relu":
            y = jnp.maximum(y, 0.0)
        elif act == "sigmoid":
            y = jax.nn.sigmoid(y)
        if combine == "add":
            y = y + e_ref[...].astype(jnp.float32)
        elif combine == "gate":                  # (1 + mask) * trunk
            y = (1.0 + y) * e_ref[...].astype(jnp.float32)
        o_ref[...] = y.astype(o_ref.dtype)
    return kernel


def _mm_tiles(M, N):
    """Chip-aware tile sizes; never leave a (1,1) grid when splittable."""
    tm_cap = 512 if _BIG_VMEM else 256
    tn_cap = 1024 if _BIG_VMEM else 512
    tm = min(tm_cap, _round_up(M, 8))
    tn = min(tn_cap, N) if N % 128 == 0 else N
    if pl.cdiv(M, tm) == 1 and pl.cdiv(N, tn) == 1:
        if N % 256 == 0:
            tn = N // 2                 # split N: keep lane-dense stores
        elif M > 8:
            tm = _round_up((M + 1) // 2, 8)
    return tm, tn


def pallas_fused_matmul(a, b, scale, shift, extra=None,
                        pre_scale=None, pre_shift=None,
                        act="none", combine="none", out_dtype=jnp.bfloat16):
    """A:(M,K) B:(K,N); bf16 MXU feeds, f32 accumulation; single full-K block.
    Only K is zero-padded (to a multiple of 128); M/N use cdiv grids with
    ragged last blocks (masked stores)."""
    M, K = a.shape
    K2, N = b.shape
    assert K == K2
    a = a.astype(jnp.bfloat16)
    b = b.astype(jnp.bfloat16)

    Kp = _round_up(K, 128)
    if Kp != K:
        a = jnp.pad(a, ((0, 0), (0, Kp - K)))
        b = jnp.pad(b, ((0, Kp - K), (0, 0)))

    pre = pre_scale is not None
    if pre:
        ps = pre_scale.reshape(1, K).astype(jnp.float32)
        ph = pre_shift.reshape(1, K).astype(jnp.float32)
        if Kp != K:
            ps = jnp.pad(ps, ((0, 0), (0, Kp - K)))
            ph = jnp.pad(ph, ((0, 0), (0, Kp - K)))

    tm, tn = _mm_tiles(M, N)
    grid = (pl.cdiv(M, tm), pl.cdiv(N, tn))

    s = scale.reshape(1, N).astype(jnp.float32)
    h = shift.reshape(1, N).astype(jnp.float32)

    in_specs = [pl.BlockSpec((tm, Kp), lambda i, j: (i, 0)),
                pl.BlockSpec((Kp, tn), lambda i, j: (0, j))]
    args = [a, b]
    if pre:
        in_specs += [pl.BlockSpec((1, Kp), lambda i, j: (0, 0)),
                     pl.BlockSpec((1, Kp), lambda i, j: (0, 0))]
        args += [ps, ph]
    in_specs += [pl.BlockSpec((1, tn), lambda i, j: (0, j)),
                 pl.BlockSpec((1, tn), lambda i, j: (0, j))]
    args += [s, h]
    bytes_accessed = (a.size + b.size) * 2 + M * N * jnp.dtype(out_dtype).itemsize
    if combine != "none":
        extra2d = extra.astype(jnp.bfloat16)
        in_specs.append(pl.BlockSpec((tm, tn), lambda i, j: (i, j)))
        args.append(extra2d)
        bytes_accessed += extra2d.size * 2

    cost = pl.CostEstimate(
        flops=2 * M * N * Kp,
        transcendentals=(M * N if act == "sigmoid" else 0),
        bytes_accessed=int(bytes_accessed))

    out = pl.pallas_call(
        _make_mm_kernel(pre, act, combine),
        out_shape=jax.ShapeDtypeStruct((M, N), out_dtype),
        grid_spec=pltpu.PrefetchScalarGridSpec(
            num_scalar_prefetch=0,
            grid=grid,
            in_specs=in_specs,
            out_specs=pl.BlockSpec((tm, tn), lambda i, j: (i, j))),
        compiler_params=pltpu.CompilerParams(
            dimension_semantics=("parallel", "parallel"),
            vmem_limit_bytes=_VMEM_LIMIT),
        cost_estimate=cost,
    )(*args)
    return out


# ----------------------------------------------------------------------------
# Direct 3x3 stride-1 conv kernel (no im2col materialisation in HBM)
# ----------------------------------------------------------------------------

def _make_conv3x3_kernel(Mf, Wp, Cin, act):
    def kernel(x_ref, w_ref, s_ref, h_ref, o_ref):
        acc = None
        for t in range(9):
            dy, dx = divmod(t, 3)
            off = dy * Wp + dx
            a = x_ref[0, off:off + Mf, :]                    # (Mf, Cin) bf16
            wk = w_ref[t * Cin:(t + 1) * Cin, :]             # (Cin, Cout) bf16
            d = jnp.dot(a, wk, preferred_element_type=jnp.float32)
            acc = d if acc is None else acc + d
        y = acc * s_ref[...] + h_ref[...]
        if act == "relu":
            y = jnp.maximum(y, 0.0)
        elif act == "sigmoid":
            y = jax.nn.sigmoid(y)
        o_ref[0] = y.astype(o_ref.dtype)
    return kernel


def _conv3x3_direct(x, w, scale, shift, act="relu", out_dtype=jnp.bfloat16):
    """3x3 / stride 1 / pad 1 conv with fused BN affine + activation epilogue.

    The padded image is flattened to (rows, Cin); each of the 9 taps is a
    contiguous shifted window of that flat view, so the kernel does 9 MXU
    matmuls with f32 accumulation and never writes an im2col tensor to HBM.
    Outputs are produced on the width-padded grid; the two garbage columns
    per row are sliced away afterwards."""
    B, H, W, Cin = x.shape
    Cout = w.shape[0]
    Wp = W + 2                      # padded width
    Mf = H * Wp                     # flat output rows (incl. 2 garbage cols/row)
    Lp = (H + 3) * Wp               # flat padded input rows (extra bottom row)

    xb = x.astype(jnp.bfloat16)
    xp = jnp.pad(xb, ((0, 0), (1, 2), (1, 1), (0, 0)))       # (B, H+3, W+2, Cin)
    xf = xp.reshape(B, Lp, Cin)
    wmat = jnp.transpose(w, (2, 3, 1, 0)).reshape(9 * Cin, Cout).astype(jnp.bfloat16)
    s = scale.reshape(1, Cout).astype(jnp.float32)
    h = shift.reshape(1, Cout).astype(jnp.float32)

    cost = pl.CostEstimate(
        flops=2 * B * Mf * 9 * Cin * Cout,
        transcendentals=0,
        bytes_accessed=int(xf.size * 2 + wmat.size * 2
                           + B * Mf * Cout * jnp.dtype(out_dtype).itemsize))

    out = pl.pallas_call(
        _make_conv3x3_kernel(Mf, Wp, Cin, act),
        out_shape=jax.ShapeDtypeStruct((B, Mf, Cout), out_dtype),
        grid_spec=pltpu.PrefetchScalarGridSpec(
            num_scalar_prefetch=0,
            grid=(B,),
            in_specs=[pl.BlockSpec((1, Lp, Cin), lambda b: (b, 0, 0)),
                      pl.BlockSpec((9 * Cin, Cout), lambda b: (0, 0)),
                      pl.BlockSpec((1, Cout), lambda b: (0, 0)),
                      pl.BlockSpec((1, Cout), lambda b: (0, 0))],
            out_specs=pl.BlockSpec((1, Mf, Cout), lambda b: (b, 0, 0))),
        compiler_params=pltpu.CompilerParams(
            dimension_semantics=("parallel",),
            vmem_limit_bytes=_VMEM_LIMIT),
        cost_estimate=cost,
    )(xf, wmat, s, h)
    return out.reshape(B, H, Wp, Cout)[:, :, :W, :]


# ----------------------------------------------------------------------------
# Standalone fused affine + activation (final BatchNorm inference + ReLU)
# ----------------------------------------------------------------------------

def _make_affine_kernel(act):
    def kernel(x_ref, s_ref, h_ref, o_ref):
        y = x_ref[...].astype(jnp.float32) * s_ref[...] + h_ref[...]
        if act == "relu":
            y = jnp.maximum(y, 0.0)
        elif act == "sigmoid":
            y = jax.nn.sigmoid(y)
        o_ref[...] = y.astype(o_ref.dtype)
    return kernel


def pallas_affine_act(x2d, scale, shift, act="none", out_dtype=jnp.float32):
    M, C = x2d.shape
    rows = max(256, min(1024, (1 << 20) // max(C, 1)))        # ~2-4 MB blocks
    tm = min(_round_up(M, 8), _round_up(rows, 8))
    s = scale.reshape(1, C).astype(jnp.float32)
    h = shift.reshape(1, C).astype(jnp.float32)
    return pl.pallas_call(
        _make_affine_kernel(act),
        out_shape=jax.ShapeDtypeStruct((M, C), out_dtype),
        grid_spec=pltpu.PrefetchScalarGridSpec(
            num_scalar_prefetch=0,
            grid=(pl.cdiv(M, tm),),
            in_specs=[pl.BlockSpec((tm, C), lambda i: (i, 0)),
                      pl.BlockSpec((1, C), lambda i: (0, 0)),
                      pl.BlockSpec((1, C), lambda i: (0, 0))],
            out_specs=pl.BlockSpec((tm, C), lambda i: (i, 0))),
        compiler_params=pltpu.CompilerParams(
            dimension_semantics=("parallel",),
            vmem_limit_bytes=_VMEM_LIMIT),
    )(x2d, s, h)


@functools.partial(jax.jit, static_argnames=("act", "out_dtype"))
def bn_act(x, scale, shift, act="relu", out_dtype=jnp.float32):
    B, H, W, C = x.shape
    y = pallas_affine_act(x.reshape(-1, C), scale, shift, act=act,
                          out_dtype=out_dtype)
    return y.reshape(B, H, W, C)


# ----------------------------------------------------------------------------
# Convolution dispatcher
# ----------------------------------------------------------------------------

@functools.partial(jax.jit,
                   static_argnames=("stride", "padding", "act", "combine",
                                    "out_dtype"))
def conv2d_fused(x, w, scale=None, shift=None, extra=None,
                 pre_scale=None, pre_shift=None,
                 stride=1, padding=0, act="none", combine="none",
                 out_dtype=jnp.bfloat16):
    """x: (B,H,W,Cin) NHWC.  w: (Cout,Cin,kh,kw) (PyTorch layout), bias=False.

    combine(act(BN_affine(conv(relu(pre_bn(x)), w))), extra) with everything
    fused into one Pallas kernel.  Dispatches between:
      - direct 3x3 stride-1 kernel (no im2col),
      - 1x1 matmul (optionally with in-kernel pre-activation),
      - im2col + matmul fallback (7x7 stem conv, stride-2 3x3 convs)."""
    B, H, W, Cin = x.shape
    Cout, _, kh, kw = w.shape
    Ho = (H + 2 * padding - kh) // stride + 1
    Wo = (W + 2 * padding - kw) // stride + 1
    if scale is None:
        scale = jnp.ones((Cout,), jnp.float32)
    if shift is None:
        shift = jnp.zeros((Cout,), jnp.float32)

    if (kh, kw) == (3, 3) and stride == 1 and padding == 1 \
            and combine == "none" and pre_scale is None:
        return _conv3x3_direct(x, w, scale, shift, act=act, out_dtype=out_dtype)

    xb = x.astype(jnp.bfloat16)
    if kh == 1 and kw == 1 and padding == 0:
        xs = xb[:, ::stride, ::stride, :] if stride != 1 else xb
        patches = xs.reshape(B * Ho * Wo, Cin)
        wmat = w.reshape(Cout, Cin).T                          # (Cin, Cout)
        ps, ph = pre_scale, pre_shift
    else:
        # im2col fallback (7x7 stem conv, stride-2 3x3 convs).
        xp = jnp.pad(xb, ((0, 0), (padding, padding), (padding, padding), (0, 0)))
        cols = [xp[:, dy:dy + stride * Ho:stride, dx:dx + stride * Wo:stride, :]
                for dy in range(kh) for dx in range(kw)]
        patches = jnp.concatenate(cols, axis=-1).reshape(B * Ho * Wo,
                                                         kh * kw * Cin)
        wmat = jnp.transpose(w, (2, 3, 1, 0)).reshape(kh * kw * Cin, Cout)
        ps = None if pre_scale is None else jnp.tile(pre_scale, kh * kw)
        ph = None if pre_shift is None else jnp.tile(pre_shift, kh * kw)

    extra2d = None if extra is None else extra.reshape(B * Ho * Wo, Cout)
    out = pallas_fused_matmul(patches, wmat, scale, shift, extra=extra2d,
                              pre_scale=ps, pre_shift=ph,
                              act=act, combine=combine, out_dtype=out_dtype)
    return out.reshape(B, Ho, Wo, Cout)


# ----------------------------------------------------------------------------
# Plain-JAX glue: pooling, bilinear upsampling
# ----------------------------------------------------------------------------

def maxpool_3x3_s2_p1(x):
    init = jnp.asarray(-jnp.inf, dtype=x.dtype)
    return lax.reduce_window(x, init, lax.max,
                             window_dimensions=(1, 3, 3, 1),
                             window_strides=(1, 2, 2, 1),
                             padding=((0, 0), (1, 1), (1, 1), (0, 0)))


def upsample_bilinear_align_corners(x, out_hw):
    """UpsamplingBilinear2d(size=out_hw), align_corners=True (PyTorch)."""
    B, H, W, C = x.shape
    Ho, Wo = out_hw
    if (H, W) == (Ho, Wo):
        return x.astype(jnp.float32)

    def grid(n_in, n_out):
        if n_out == 1:
            c = jnp.zeros((1,), jnp.float32)
        else:
            c = jnp.arange(n_out, dtype=jnp.float32) * ((n_in - 1) / (n_out - 1))
        i0 = jnp.clip(jnp.floor(c), 0, n_in - 1).astype(jnp.int32)
        i1 = jnp.clip(i0 + 1, 0, n_in - 1)
        wgt = c - i0.astype(jnp.float32)
        return i0, i1, wgt

    y0, y1, wy = grid(H, Ho)
    x0, x1, wx = grid(W, Wo)
    top = jnp.take(x, y0, axis=1)
    bot = jnp.take(x, y1, axis=1)
    v = top * (1.0 - wy)[None, :, None, None] + bot * wy[None, :, None, None]
    left = jnp.take(v, x0, axis=2)
    right = jnp.take(v, x1, axis=2)
    return left * (1.0 - wx)[None, None, :, None] + right * wx[None, None, :, None]


def _merge(up_src, size, *adds):
    """upsample(up_src) + sum(adds), stored bf16 for the downstream convs."""
    y = upsample_bilinear_align_corners(up_src, size)
    for a in adds:
        y = y + a.astype(jnp.float32)
    return y.astype(jnp.bfloat16)


# ----------------------------------------------------------------------------
# Deterministic synthetic parameters
# ----------------------------------------------------------------------------

class ParamFactory:
    def __init__(self, seed=0):
        self.rng = np.random.RandomState(seed)

    def conv(self, cin, cout, k):
        fan_in = cin * k * k
        w = self.rng.normal(0.0, 1.0 / np.sqrt(fan_in),
                            (cout, cin, k, k)).astype(np.float32)
        return jnp.asarray(w)

    def bn(self, c):
        gamma = (1.0 + 0.1 * self.rng.normal(size=c)).astype(np.float32)
        beta = (0.05 * self.rng.normal(size=c)).astype(np.float32)
        mean = (0.05 * self.rng.normal(size=c)).astype(np.float32)
        var = (1.0 + 0.1 * np.abs(self.rng.normal(size=c))).astype(np.float32)
        eps = 1e-5
        scale = gamma / np.sqrt(var + eps)
        shift = beta - mean * scale
        return jnp.asarray(scale), jnp.asarray(shift)

    def linear(self, cin, cout):
        w = self.rng.normal(0.0, 1.0 / np.sqrt(cin), (cout, cin)).astype(np.float32)
        b = (0.01 * self.rng.normal(size=cout)).astype(np.float32)
        return jnp.asarray(w), jnp.asarray(b)


# --------------------------- ResidualBlock ----------------------------------

def rb_params(pf, in_c, out_c, stride=1):
    mid = out_c // 4
    p = {"stride": stride, "in_c": in_c, "out_c": out_c}
    p["bn1"] = pf.bn(in_c)
    p["conv1"] = pf.conv(in_c, mid, 1)
    p["bn2"] = pf.bn(mid)
    p["conv2"] = pf.conv(mid, mid, 3)
    p["bn3"] = pf.bn(mid)
    p["conv3"] = pf.conv(mid, out_c, 1)
    if stride != 1 or in_c != out_c:
        p["conv4"] = pf.conv(in_c, out_c, 1)
    return p


def residual_block(x, p):
    stride = p["stride"]
    bn1_s, bn1_h = p["bn1"]
    # conv1 (1x1): in-kernel pre-activation relu(bn1(x)) + fused bn2+relu
    out = conv2d_fused(x, p["conv1"], scale=p["bn2"][0], shift=p["bn2"][1],
                       pre_scale=bn1_s, pre_shift=bn1_h,
                       act="relu", out_dtype=jnp.bfloat16)
    # conv2 (3x3, stride): fused bn3+relu epilogue (direct kernel if stride 1)
    out = conv2d_fused(out, p["conv2"], scale=p["bn3"][0], shift=p["bn3"][1],
                       stride=stride, padding=1, act="relu",
                       out_dtype=jnp.bfloat16)
    # residual branch
    if "conv4" in p:
        residual = conv2d_fused(x, p["conv4"], pre_scale=bn1_s, pre_shift=bn1_h,
                                stride=stride, out_dtype=jnp.bfloat16)
    else:
        residual = x.astype(jnp.bfloat16)
    # conv3 (1x1): fused residual add, bf16 residual stream
    return conv2d_fused(out, p["conv3"], extra=residual, combine="add",
                        out_dtype=jnp.bfloat16)


# --------------------------- Attention gate ---------------------------------

def gate_params(pf, c):
    return {"bn1": pf.bn(c), "conv1": pf.conv(c, c, 1),
            "bn2": pf.bn(c), "conv2": pf.conv(c, c, 1)}


def gate_and_mask(x, trunk, p):
    """(1 + sigmoid(conv2(relu(bn2(conv1(relu(bn1(x)))))))) * trunk."""
    out = conv2d_fused(x, p["conv1"], scale=p["bn2"][0], shift=p["bn2"][1],
                       pre_scale=p["bn1"][0], pre_shift=p["bn1"][1],
                       act="relu", out_dtype=jnp.bfloat16)
    return conv2d_fused(out, p["conv2"], extra=trunk, act="sigmoid",
                        combine="gate", out_dtype=jnp.bfloat16)


# --------------------------- Attention modules -------------------------------

def att_stage1_params(pf, c):
    return {
        "first": rb_params(pf, c, c),
        "trunk": [rb_params(pf, c, c), rb_params(pf, c, c)],
        "softmax1": rb_params(pf, c, c),
        "skip1": rb_params(pf, c, c),
        "softmax2": rb_params(pf, c, c),
        "skip2": rb_params(pf, c, c),
        "softmax3": [rb_params(pf, c, c), rb_params(pf, c, c)],
        "softmax4": rb_params(pf, c, c),
        "softmax5": rb_params(pf, c, c),
        "gate": gate_params(pf, c),
        "last": rb_params(pf, c, c),
    }


def attention_stage1(x, p):
    x = residual_block(x, p["first"])
    out_trunk = x
    for rp in p["trunk"]:
        out_trunk = residual_block(out_trunk, rp)
    size1 = x.shape[1:3]
    out_mpool1 = maxpool_3x3_s2_p1(x)
    out_softmax1 = residual_block(out_mpool1, p["softmax1"])
    size2 = out_softmax1.shape[1:3]
    out_skip1 = residual_block(out_softmax1, p["skip1"])
    out_mpool2 = maxpool_3x3_s2_p1(out_softmax1)
    out_softmax2 = residual_block(out_mpool2, p["softmax2"])
    size3 = out_softmax2.shape[1:3]
    out_skip2 = residual_block(out_softmax2, p["skip2"])
    out_mpool3 = maxpool_3x3_s2_p1(out_softmax2)
    out_softmax3 = out_mpool3
    for rp in p["softmax3"]:
        out_softmax3 = residual_block(out_softmax3, rp)
    out = _merge(out_softmax3, size3, out_softmax2, out_skip2)
    out_softmax4 = residual_block(out, p["softmax4"])
    out = _merge(out_softmax4, size2, out_softmax1, out_skip1)
    out_softmax5 = residual_block(out, p["softmax5"])
    out_interp1 = _merge(out_softmax5, size1, out_trunk)
    out = gate_and_mask(out_interp1, out_trunk, p["gate"])
    return residual_block(out, p["last"])


def att_stage2_params(pf, c):
    return {
        "first": rb_params(pf, c, c),
        "trunk": [rb_params(pf, c, c), rb_params(pf, c, c)],
        "softmax1": rb_params(pf, c, c),
        "skip1": rb_params(pf, c, c),
        "softmax2": [rb_params(pf, c, c), rb_params(pf, c, c)],
        "softmax3": rb_params(pf, c, c),
        "gate": gate_params(pf, c),
        "last": rb_params(pf, c, c),
    }


def attention_stage2(x, p):
    x = residual_block(x, p["first"])
    out_trunk = x
    for rp in p["trunk"]:
        out_trunk = residual_block(out_trunk, rp)
    size1 = x.shape[1:3]
    out_mpool1 = maxpool_3x3_s2_p1(x)
    out_softmax1 = residual_block(out_mpool1, p["softmax1"])
    size2 = out_softmax1.shape[1:3]
    out_skip1 = residual_block(out_softmax1, p["skip1"])
    out_mpool2 = maxpool_3x3_s2_p1(out_softmax1)
    out_softmax2 = out_mpool2
    for rp in p["softmax2"]:
        out_softmax2 = residual_block(out_softmax2, rp)
    out = _merge(out_softmax2, size2, out_softmax1, out_skip1)
    out_softmax3 = residual_block(out, p["softmax3"])
    out_interp1 = _merge(out_softmax3, size1, out_trunk)
    out = gate_and_mask(out_interp1, out_trunk, p["gate"])
    return residual_block(out, p["last"])


def att_stage3_params(pf, c):
    return {
        "first": rb_params(pf, c, c),
        "trunk": [rb_params(pf, c, c), rb_params(pf, c, c)],
        "softmax1": [rb_params(pf, c, c), rb_params(pf, c, c)],
        "gate": gate_params(pf, c),
        "last": rb_params(pf, c, c),
    }


def attention_stage3(x, p):
    x = residual_block(x, p["first"])
    out_trunk = x
    for rp in p["trunk"]:
        out_trunk = residual_block(out_trunk, rp)
    size1 = x.shape[1:3]
    out_mpool1 = maxpool_3x3_s2_p1(x)
    out_softmax1 = out_mpool1
    for rp in p["softmax1"]:
        out_softmax1 = residual_block(out_softmax1, rp)
    out_interp1 = _merge(out_softmax1, size1, out_trunk)
    out = gate_and_mask(out_interp1, out_trunk, p["gate"])
    return residual_block(out, p["last"])


# --------------------------- Full model --------------------------------------

def build_params(seed=0):
    pf = ParamFactory(seed)
    P = {}
    P["conv1_w"] = pf.conv(3, 64, 7)
    P["conv1_bn"] = pf.bn(64)
    P["rb1"] = rb_params(pf, 64, 256)
    P["att1"] = att_stage1_params(pf, 256)
    P["rb2"] = rb_params(pf, 256, 512, 2)
    P["att2"] = att_stage2_params(pf, 512)
    P["rb3"] = rb_params(pf, 512, 1024, 2)
    P["att3"] = att_stage3_params(pf, 1024)
    P["rb4"] = rb_params(pf, 1024, 2048, 2)
    P["rb5"] = rb_params(pf, 2048, 2048)
    P["rb6"] = rb_params(pf, 2048, 2048)
    P["final_bn"] = pf.bn(2048)
    P["fc_w"], P["fc_b"] = pf.linear(2048, 10)
    return P


def forward(x_nchw, P):
    x = jnp.transpose(x_nchw.astype(jnp.float32), (0, 2, 3, 1))   # NCHW -> NHWC
    # conv1: Conv2d(3,64,7,2,3) with fused BN + ReLU epilogue (im2col path)
    x = conv2d_fused(x, P["conv1_w"], scale=P["conv1_bn"][0],
                     shift=P["conv1_bn"][1], stride=2, padding=3,
                     act="relu", out_dtype=jnp.bfloat16)
    x = maxpool_3x3_s2_p1(x)
    x = residual_block(x, P["rb1"])
    x = attention_stage1(x, P["att1"])
    x = residual_block(x, P["rb2"])
    x = attention_stage2(x, P["att2"])
    x = residual_block(x, P["rb3"])
    x = attention_stage3(x, P["att3"])
    x = residual_block(x, P["rb4"])
    x = residual_block(x, P["rb5"])
    x = residual_block(x, P["rb6"])
    # mpool2: BN + ReLU + AvgPool2d(7, stride=1)
    x = bn_act(x, *P["final_bn"], act="relu", out_dtype=jnp.float32)
    k = min(7, x.shape[1])
    x = lax.reduce_window(x, jnp.asarray(0.0, x.dtype), lax.add,
                          window_dimensions=(1, k, k, 1),
                          window_strides=(1, 1, 1, 1),
                          padding=((0, 0), (0, 0), (0, 0), (0, 0))) / float(k * k)
    x = x.reshape(x.shape[0], -1)                                  # (B, 2048)
    # fc: Linear(2048, 10) -- output padded to 128 lanes, bias as the shift
    n_out = P["fc_w"].shape[0]
    w_pad = jnp.zeros((P["fc_w"].shape[1], 128), jnp.float32).at[:, :n_out].set(P["fc_w"].T)
    b_pad = jnp.zeros((128,), jnp.float32).at[:n_out].set(P["fc_b"])
    logits = pallas_fused_matmul(x, w_pad, jnp.ones((128,), jnp.float32), b_pad,
                                 act="none", combine="none",
                                 out_dtype=jnp.float32)[:, :n_out]
    return logits


if __name__ == "__main__":
    # Small synthetic test input (design size is 224; scaled to 32 for speed).
    key = jax.random.PRNGKey(0)
    x = jax.random.normal(key, (2, 3, 32, 32), dtype=jnp.float32)   # NCHW
    params = build_params(seed=0)
    out = forward(x, params)
    out = jax.block_until_ready(out)
    assert out.shape == (2, 10), out.shape
    assert bool(jnp.all(jnp.isfinite(out)))
    print("KERNEL_OK")
</pallas_src>

<mosaic_0001>
module attributes {stable_mosaic.version = 11 : i64} {
  func.func @kernel(%arg0: i32, %arg1: i32, %arg2: memref<256x256xbf16, #tpu.memory_space<vmem>>, %arg3: memref<256x64xbf16, #tpu.memory_space<vmem>>, %arg4: memref<1x64xf32, #tpu.memory_space<vmem>>, %arg5: memref<1x64xf32, #tpu.memory_space<vmem>>, %arg6: memref<256x64xbf16, #tpu.memory_space<vmem>>) attributes {dimension_semantics = [#tpu.dimension_semantics<parallel>, #tpu.dimension_semantics<parallel>], iteration_bounds = array<i64: 2, 1>, scalar_prefetch = 0 : i64, scratch_operands = 0 : i64, tpu.core_type = #tpu.core_type<tc>, window_params = [{transform_indices = @transform_0, window_bounds = array<i64: 256, 256>}, {transform_indices = @transform_1, window_bounds = array<i64: 256, 64>}, {transform_indices = @transform_2, window_bounds = array<i64: 1, 64>}, {transform_indices = @transform_3, window_bounds = array<i64: 1, 64>}, {transform_indices = @transform_4, window_bounds = array<i64: 256, 64>}]} {
    %c0 = arith.constant 0 : index
    %c0_0 = arith.constant 0 : index
    %0 = vector.load %arg2[%c0, %c0_0] : memref<256x256xbf16, #tpu.memory_space<vmem>>, vector<256x256xbf16>
    %c0_1 = arith.constant 0 : index
    %c0_2 = arith.constant 0 : index
    %1 = vector.load %arg3[%c0_1, %c0_2] : memref<256x64xbf16, #tpu.memory_space<vmem>>, vector<256x64xbf16>
    %cst = arith.constant dense<0.000000e+00> : vector<256x64xf32>
    %2 = tpu.matmul %0, %1, %cst {dimension_numbers = #tpu.dot_dimension_numbers<[1], [0], [0], [1], [0, 0, 1, 1], [], []>} : vector<256x256xbf16>, vector<256x64xbf16>, vector<256x64xf32> -> vector<256x64xf32>
    %c0_3 = arith.constant 0 : index
    %c0_4 = arith.constant 0 : index
    %3 = vector.load %arg4[%c0_3, %c0_4] : memref<1x64xf32, #tpu.memory_space<vmem>>, vector<1x64xf32>
    %4 = vector.broadcast %3 : vector<1x64xf32> to vector<256x64xf32>
    %5 = arith.mulf %2, %4 : vector<256x64xf32>
    %c0_5 = arith.constant 0 : index
    %c0_6 = arith.constant 0 : index
    %6 = vector.load %arg5[%c0_5, %c0_6] : memref<1x64xf32, #tpu.memory_space<vmem>>, vector<1x64xf32>
    %7 = vector.broadcast %6 : vector<1x64xf32> to vector<256x64xf32>
    %8 = arith.addf %5, %7 : vector<256x64xf32>
    %cst_7 = arith.constant 0.000000e+00 : f32
    %9 = vector.broadcast %cst_7 : f32 to vector<256x64xf32>
    %10 = arith.maximumf %8, %9 : vector<256x64xf32>
    %11 = arith.truncf %10 : vector<256x64xf32> to vector<256x64xbf16>
    %c0_8 = arith.constant 0 : index
    %c0_9 = arith.constant 0 : index
    %12 = vector.load %arg6[%c0_8, %c0_9] : memref<256x64xbf16, #tpu.memory_space<vmem>>, vector<256x64xbf16>
    tpu.vector_store %arg6[%c0_8, %c0_9], %11 {strides = array<i32>} : memref<256x64xbf16, #tpu.memory_space<vmem>>, vector<256x64xbf16>,
    return
  }
  func.func @transform_0(%arg0: i32, %arg1: i32) -> (i32, i32) {
    %c0_i32 = arith.constant 0 : i32
    %c0_i32_0 = arith.constant 0 : i32
    return %arg0, %c0_i32 : i32, i32
  }
  func.func @transform_1(%arg0: i32, %arg1: i32) -> (i32, i32) {
    %c0_i32 = arith.constant 0 : i32
    %c0_i32_0 = arith.constant 0 : i32
    return %c0_i32, %arg1 : i32, i32
  }
  func.func @transform_2(%arg0: i32, %arg1: i32) -> (i32, i32) {
    %c0_i32 = arith.constant 0 : i32
    %c0_i32_0 = arith.constant 0 : i32
    return %c0_i32, %arg1 : i32, i32
  }
  func.func @transform_3(%arg0: i32, %arg1: i32) -> (i32, i32) {
    %c0_i32 = arith.constant 0 : i32
    %c0_i32_0 = arith.constant 0 : i32
    return %c0_i32, %arg1 : i32, i32
  }
  func.func @transform_4(%arg0: i32, %arg1: i32) -> (i32, i32) {
    %c0_i32 = arith.constant 0 : i32
    return %arg0, %arg1 : i32, i32
  }
}

</mosaic_0001>

<llo_original>
// kernel: conv2d_fused.1
$region0: #{conv2d_fused.1}
  #allocation0 [shape = 'u32[]', space=smem, size = 0x4, offset = 0x4, fixed_abs, tag = 'smem constant byte address 0x4 - core index']
  #allocation1 [shape = 'u32[144,128]{1,0:T(1,128)}', space=vmem, size = 0x12000, scoped, tag = 'internal scratch']
  %s0 = inlined_call_operand.vmem [shape: bf16[512,256], index: 0, kind: input, shape index: {}]
  %s1 = inlined_call_operand.vmem [shape: bf16[256,64], index: 1, kind: input, shape index: {}]
  %s2 = inlined_call_operand.vmem [shape: f32[1,64], index: 2, kind: input, shape index: {}]
  %s3 = inlined_call_operand.vmem [shape: f32[1,64], index: 3, kind: input, shape index: {}]
  %s4 = inlined_call_operand.hbm [shape: bf16[512,64], index: 4, kind: output, shape index: {}]
  %s5 = sld [smem:[#allocation0]]
  $region49: #{conv2d_fused.1} parent=0
    _
  %s7 = ssub.s32 1, %s5
  %s8 = scalar_select 0, %s7, %s5
  $region1: #{conv2d_fused.1} parent=0
    #allocation2 [shape = 'u8[131072]{0}', space=vmem, size = 0x20000, scoped, tag = 'output window, operand 0']
    #allocation3 [shape = 's32[2]{0}', space=sflag, size = 0x8, scoped, tag = 'scoped memory for conv2d_fused.1']
    %9 = vsyncpa [#allocation3], 0
    %s10 = scalar_lea.sflag [#allocation3], 1
    %11 = vsyncpa %s10, 0
    loop: start=0, step=1, limit=4
    $region2: #{conv2d_fused.1} parent=1 // loop_pre_header
      _
    $region3: #{conv2d_fused.1} parent=1 // loop_header
      %s13 = sphi 0, %s17
      %p14 = scmp.ge.s32.totalorder %s13, 4
      %s20 = sphi 0, %s32
      %s21 = sphi 0, %s28
      %s22 = sphi 0, %s20
      %s23 = sphi 0, %s21
      %s24 = sphi 0, %s22
      %s25 = sphi 0, %s23
      %s35 = sphi 0, %s37
      %s38 = sphi 0, %s35
      %s39 = sphi 0, %s38
      %s55 = sphi 0, %s39
      %s61 = sphi 0, %s63
      %s64 = sphi 0, %s61
      %s65 = sphi 0, %s64
      %s81 = sphi 0, %s65
      %s87 = sphi 0, %s89
      %s90 = sphi 0, %s87
      %s91 = sphi 0, %s90
      %s107 = sphi 0, %s91
      %s113 = sphi 0, %s115
      %s116 = sphi 0, %s113
      %s117 = sphi 0, %s116
      %s133 = sphi 0, %s117
      %s141 = sphi 0, %s143
      %s144 = sphi 0, %s141
      %s145 = sphi 0, %s144
      %s161 = sphi 0, %s145
    $region4: #{conv2d_fused.1} parent=1 // loop_header_branch
      %16 = sbr.rel (%p14) target = $region8
    $region5: #{conv2d_fused.1} parent=1 // loop_body
      %s18 = ssub.s32 %s13, 1
      %s19 = ssub.s32 %s13, 2
      %s26 = sadd.s32 1, %s21
      %p27 = scmp.ge.s32.totalorder %s26, 1
      %s28 = scalar_select %p27, 0, %s26
      %s29 = sadd.s32 1, %s20
      %s30 = scalar_select %p27, %s29, %s20
      %p31 = scmp.ge.s32.totalorder %s30, 2
      %s32 = scalar_select %p31, 0, %s30
      %s33 = ssub.s32 %s20, %s32
      %p34 = scmp.eq.s32.totalorder %s33, 0
      %s36 = sadd.s32 %s35, 1
      %s37 = scalar_select %p34, %s35, %s36
      %p40 = pneg %p34
      %p41 = scmp.eq.s32.totalorder %s13, 1
      %p42 = por %p40, %p41
      %p43 = scmp.ne.s32.totalorder %s35, %s38
      %p44 = scmp.eq.s32.totalorder %s13, 0
      %p45 = por %p43, %p44
      %p46 = scmp.ne.s32.totalorder %s35, %s38
      %p47 = scmp.eq.s32.totalorder %s18, 1
      %p48 = por %p46, %p47
      %p49 = scmp.ne.s32.totalorder %s38, %s39
      %p50 = scmp.eq.s32.totalorder %s18, 0
      %p51 = por %p49, %p50
      %p52 = scmp.ne.s32.totalorder %s38, %s39
      %p53 = scmp.eq.s32.totalorder %s19, 1
      %p54 = por %p52, %p53
      %p56 = scmp.ne.s32.totalorder %s39, %s55
      %p57 = scmp.eq.s32.totalorder %s19, 0
      %p58 = por %p56, %p57
      %s59 = ssub.s32 %s21, %s28
      %p60 = scmp.eq.s32.totalorder %s59, 0
      %s62 = sadd.s32 %s61, 1
      %s63 = scalar_select %p60, %s61, %s62
      %p66 = pneg %p60
      %p67 = scmp.eq.s32.totalorder %s13, 1
      %p68 = por %p66, %p67
      %p69 = scmp.ne.s32.totalorder %s61, %s64
      %p70 = scmp.eq.s32.totalorder %s13, 0
      %p71 = por %p69, %p70
      %p72 = scmp.ne.s32.totalorder %s61, %s64
      %p73 = scmp.eq.s32.totalorder %s18, 1
      %p74 = por %p72, %p73
      %p75 = scmp.ne.s32.totalorder %s64, %s65
      %p76 = scmp.eq.s32.totalorder %s18, 0
      %p77 = por %p75, %p76
      %p78 = scmp.ne.s32.totalorder %s64, %s65
      %p79 = scmp.eq.s32.totalorder %s19, 1
      %p80 = por %p78, %p79
      %p82 = scmp.ne.s32.totalorder %s65, %s81
      %p83 = scmp.eq.s32.totalorder %s19, 0
      %p84 = por %p82, %p83
      %s85 = ssub.s32 %s21, %s28
      %p86 = scmp.eq.s32.totalorder %s85, 0
      %s88 = sadd.s32 %s87, 1
      %s89 = scalar_select %p86, %s87, %s88
      %p92 = pneg %p86
      %p93 = scmp.eq.s32.totalorder %s13, 1
      %p94 = por %p92, %p93
      %p95 = scmp.ne.s32.totalorder %s87, %s90
      %p96 = scmp.eq.s32.totalorder %s13, 0
      %p97 = por %p95, %p96
      %p98 = scmp.ne.s32.totalorder %s87, %s90
      %p99 = scmp.eq.s32.totalorder %s18, 1
      %p100 = por %p98, %p99
      %p101 = scmp.ne.s32.totalorder %s90, %s91
      %p102 = scmp.eq.s32.totalorder %s18, 0
      %p103 = por %p101, %p102
      %p104 = scmp.ne.s32.totalorder %s90, %s91
      %p105 = scmp.eq.s32.totalorder %s19, 1
      %p106 = por %p104, %p105
      %p108 = scmp.ne.s32.totalorder %s91, %s107
      %p109 = scmp.eq.s32.totalorder %s19, 0
      %p110 = por %p108, %p109
      %s111 = ssub.s32 %s21, %s28
      %p112 = scmp.eq.s32.totalorder %s111, 0
      %s114 = sadd.s32 %s113, 1
      %s115 = scalar_select %p112, %s113, %s114
      %p118 = pneg %p112
      %p119 = scmp.eq.s32.totalorder %s13, 1
      %p120 = por %p118, %p119
      %p121 = scmp.ne.s32.totalorder %s113, %s116
      %p122 = scmp.eq.s32.totalorder %s13, 0
      %p123 = por %p121, %p122
      %p124 = scmp.ne.s32.totalorder %s113, %s116
      %p125 = scmp.eq.s32.totalorder %s18, 1
      %p126 = por %p124, %p125
      %p127 = scmp.ne.s32.totalorder %s116, %s117
      %p128 = scmp.eq.s32.totalorder %s18, 0
      %p129 = por %p127, %p128
      %p130 = scmp.ne.s32.totalorder %s116, %s117
      %p131 = scmp.eq.s32.totalorder %s19, 1
      %p132 = por %p130, %p131
      %p134 = scmp.ne.s32.totalorder %s117, %s133
      %p135 = scmp.eq.s32.totalorder %s19, 0
      %p136 = por %p134, %p135
      %s137 = ssub.s32 %s20, %s32
      %s138 = ssub.s32 %s21, %s28
      %s139 = sor.u32 %s137, %s138
      %p140 = scmp.eq.s32.totalorder %s139, 0
      %s142 = sadd.s32 %s141, 1
      %s143 = scalar_select %p140, %s141, %s142
      %p146 = pneg %p140
      %p147 = scmp.eq.s32.totalorder %s13, 1
      %p148 = por %p146, %p147
      %p149 = scmp.ne.s32.totalorder %s141, %s144
      %p150 = scmp.eq.s32.totalorder %s13, 0
      %p151 = por %p149, %p150
      %p152 = scmp.ne.s32.totalorder %s141, %s144
      %p153 = scmp.eq.s32.totalorder %s18, 1
      %p154 = por %p152, %p153
      %p155 = scmp.ne.s32.totalorder %s144, %s145
      %p156 = scmp.eq.s32.totalorder %s18, 0
      %p157 = por %p155, %p156
      %p158 = scmp.ne.s32.totalorder %s144, %s145
      %p159 = scmp.eq.s32.totalorder %s19, 1
      %p160 = por %p158, %p159
      %p162 = scmp.ne.s32.totalorder %s145, %s161
      %p163 = scmp.eq.s32.totalorder %s19, 0
      %p164 = por %p162, %p163
      %p165 = scmp.le.s32.totalorder 1, %s13
      %p166 = scmp.lt.s32.totalorder %s13, 3
      %p167 = pnand %p165, %p166
      %p168 = pneg %p167
      // Predicated region
      $region9: #{conv2d_fused.1} parent=5 // pred_check
        _
      $region10: #{conv2d_fused.1} parent=5 // pred_check_branch
        %170 = sbr.rel (%p167) target = $region12
      $region11: #{conv2d_fused.1} parent=5 // pred_region
        %s171 = ssub.s32 %s13, 1
        // Predicated region
        $region13: #{conv2d_fused.1} parent=11 // pred_check
          %p172 = pneg %p77
        $region14: #{conv2d_fused.1} parent=11 // pred_check_branch
          %174 = sbr.rel (%p172) target = $region16
        $region15: #{conv2d_fused.1} parent=11 // pred_region
          %p175 = scmp.lt.s32.totalorder %s23, 0
          %s176 = scalar_select %p175, %s23, 0
          %s177 = smul.addr %s176, 4
          %s178 = scalar_lea.vmem %s1, %s177
        $region16: #{conv2d_fused.1} parent=11 // pred_fallthru
          _
        // Predicated region
        $region17: #{conv2d_fused.1} parent=11 // pred_check
          %p179 = pneg %p103
        $region18: #{conv2d_fused.1} parent=11 // pred_check_branch
          %181 = sbr.rel (%p179) target = $region20
        $region19: #{conv2d_fused.1} parent=11 // pred_region
          %p182 = scmp.lt.s32.totalorder %s23, 0
          %s183 = scalar_select %p182, %s23, 0
          %s184 = scalar_lea.vmem %s2, %s183
        $region20: #{conv2d_fused.1} parent=11 // pred_fallthru
          _
        // Predicated region
        $region21: #{conv2d_fused.1} parent=11 // pred_check
          %p185 = pneg %p129
        $region22: #{conv2d_fused.1} parent=11 // pred_check_branch
          %187 = sbr.rel (%p185) target = $region24
        $region23: #{conv2d_fused.1} parent=11 // pred_region
          %p188 = scmp.lt.s32.totalorder %s23, 0
          %s189 = scalar_select %p188, %s23, 0
          %s190 = scalar_lea.vmem %s3, %s189
        $region24: #{conv2d_fused.1} parent=11 // pred_fallthru
          _
      $region12: #{conv2d_fused.1} parent=5 // pred_fallthru
        _
      %p191 = scmp.lt.s32.totalorder %s13, 2
      // Predicated region
      $region25: #{conv2d_fused.1} parent=5 // pred_check
        %p192 = pneg %p191
      $region26: #{conv2d_fused.1} parent=5 // pred_check_branch
        %194 = sbr.rel (%p192) target = $region28
      $region27: #{conv2d_fused.1} parent=5 // pred_region
        // Predicated region
        $region29: #{conv2d_fused.1} parent=27 // pred_check
          %p195 = pneg %p45
        $region30: #{conv2d_fused.1} parent=27 // pred_check_branch
          %197 = sbr.rel (%p195) target = $region32
        $region31: #{conv2d_fused.1} parent=27 // pred_region
          %s198 = smul.u32 32, %s20
          %p199 = scmp.lt.s32.totalorder %s198, 63
          %s200 = scalar_select %p199, %s198, 63
          %s201 = smul.addr %s200, 2
          %s202 = smul.addr %s201, 4
          %s203 = scalar_lea.vmem %s0, %s202
          %s204 = smul.u32 32, %s20
        $region32: #{conv2d_fused.1} parent=27 // pred_fallthru
          _
      $region28: #{conv2d_fused.1} parent=5 // pred_fallthru
        _
      %p205 = scmp.le.s32.totalorder 1, %s13
      %p206 = scmp.lt.s32.totalorder %s13, 3
      %p207 = pnand %p205, %p206
      %p208 = pneg %p207
      // Predicated region
      $region33: #{conv2d_fused.1} parent=5 // pred_check
        _
      $region34: #{conv2d_fused.1} parent=5 // pred_check_branch
        %210 = sbr.rel (%p207) target = $region36
      $region35: #{conv2d_fused.1} parent=5 // pred_region
        %s211 = ssub.s32 %s13, 1
        %s212 = smul.u32 32, %s22
        %p213 = scmp.lt.s32.totalorder %s212, 63
        %s214 = scalar_select %p213, %s212, 63
        %s215 = smul.addr %s214, 2
        %s216 = smul.addr %s215, 4
        %s217 = scalar_lea.vmem %s0, %s216
        %p218 = pneg %p51
        %p219 = pneg %p48
        %p220 = scmp.lt.s32.totalorder %s23, 0
        %s221 = scalar_select %p220, %s23, 0
        %s222 = smul.addr %s221, 4
        %s223 = scalar_lea.vmem %s1, %s222
        %p224 = pneg %p77
        %p225 = pneg %p74
        %p226 = scmp.lt.s32.totalorder %s23, 0
        %s227 = scalar_select %p226, %s23, 0
        %s228 = scalar_lea.vmem %s2, %s227
        %p229 = pneg %p103
        %p230 = pneg %p100
        %p231 = scmp.lt.s32.totalorder %s23, 0
        %s232 = scalar_select %p231, %s23, 0
        %s233 = scalar_lea.vmem %s3, %s232
        %p234 = pneg %p129
        %p235 = pneg %p126
        %p236 = pneg %p157
        %p237 = pneg %p154
        %s238 = sand.u32 %s144, 1
        %s239 = scalar_lea.sflag [#allocation3], %s238
        %s240 = sand.u32 %s144, 1
        %s241 = smul.addr %s240, 128
        %s242 = scalar_lea.vmem [#allocation2], %s241
        %s243 = smul.u32 32, %s22
        %p244 = scmp.lt.s32.totalorder %s243, 63
        %s245 = scalar_select %p244, %s243, 63
        %s246 = smul.addr %s245, 2
        %s247 = smul.addr %s246, 4
        %s248 = scalar_lea.vmem %s0, %s247
        %s249 = smul.u32 32, %s22
        %p250 = scmp.lt.s32.totalorder %s23, 0
        %s251 = scalar_select %p250, %s23, 0
        %s252 = smul.addr %s251, 4
        %s253 = scalar_lea.vmem %s1, %s252
        %p254 = scmp.lt.s32.totalorder %s23, 0
        %s255 = scalar_select %p254, %s23, 0
        %s256 = scalar_lea.vmem %s2, %s255
        %p257 = scmp.lt.s32.totalorder %s23, 0
        %s258 = scalar_select %p257, %s23, 0
        %s259 = scalar_lea.vmem %s3, %s258
        %s260 = smul.u32 32, %s22
        %v262 = vld [vmem:[%s248] sm:$0xff]
        %v263 = vld [vmem:[%s248 + $0x8] sm:$0xff]
        %v264 = vld [vmem:[%s248 + $0x10] sm:$0xff]
        %v265 = vld [vmem:[%s248 + $0x18] sm:$0xff]
        %v266 = vld [vmem:[%s248 + $0x20] sm:$0xff]
        %v267 = vld [vmem:[%s248 + $0x28] sm:$0xff]
        %v268 = vld [vmem:[%s248 + $0x30] sm:$0xff]
        %v269 = vld [vmem:[%s248 + $0x38] sm:$0xff]
        %v270 = vld [vmem:[%s248 + $0x40] sm:$0xff]
        %v271 = vld [vmem:[%s248 + $0x48] sm:$0xff]
        %v272 = vld [vmem:[%s248 + $0x50] sm:$0xff]
        %v273 = vld [vmem:[%s248 + $0x58] sm:$0xff]
        %v274 = vld [vmem:[%s248 + $0x60] sm:$0xff]
        %v275 = vld [vmem:[%s248 + $0x68] sm:$0xff]
        %v276 = vld [vmem:[%s248 + $0x70] sm:$0xff]
        %v277 = vld [vmem:[%s248 + $0x78] sm:$0xff]
        %v278 = vld [vmem:[%s248 + $0x80] sm:$0xff]
        %v279 = vld [vmem:[%s248 + $0x88] sm:$0xff]
        %v280 = vld [vmem:[%s248 + $0x90] sm:$0xff]
        %v281 = vld [vmem:[%s248 + $0x98] sm:$0xff]
        %v282 = vld [vmem:[%s248 + $0xa0] sm:$0xff]
        %v283 = vld [vmem:[%s248 + $0xa8] sm:$0xff]
        %v284 = vld [vmem:[%s248 + $0xb0] sm:$0xff]
        %v285 = vld [vmem:[%s248 + $0xb8] sm:$0xff]
        %v286 = vld [vmem:[%s248 + $0xc0] sm:$0xff]
        %v287 = vld [vmem:[%s248 + $0xc8] sm:$0xff]
        %v288 = vld [vmem:[%s248 + $0xd0] sm:$0xff]
        %v289 = vld [vmem:[%s248 + $0xd8] sm:$0xff]
        %v290 = vld [vmem:[%s248 + $0xe0] sm:$0xff]
        %v291 = vld [vmem:[%s248 + $0xe8] sm:$0xff]
        %v292 = vld [vmem:[%s248 + $0xf0] sm:$0xff]
        %v293 = vld [vmem:[%s248 + $0xf8] sm:$0xff]
        %v294 = vld [vmem:[%s253] sm:$0xf]
        %v295 = vld [vmem:[%s253 + $0x4] sm:$0xf]
        %v296 = vld [vmem:[%s253 + $0x8] sm:$0xf]
        %v297 = vld [vmem:[%s253 + $0xc] sm:$0xf]
        %v298 = vld [vmem:[%s253 + $0x10] sm:$0xf]
        %v299 = vld [vmem:[%s253 + $0x14] sm:$0xf]
        %v300 = vld [vmem:[%s253 + $0x18] sm:$0xf]
        %v301 = vld [vmem:[%s253 + $0x1c] sm:$0xf]
        %v302 = vld [vmem:[%s253 + $0x20] sm:$0xf]
        %v303 = vld [vmem:[%s253 + $0x24] sm:$0xf]
        %v304 = vld [vmem:[%s253 + $0x28] sm:$0xf]
        %v305 = vld [vmem:[%s253 + $0x2c] sm:$0xf]
        %v306 = vld [vmem:[%s253 + $0x30] sm:$0xf]
        %v307 = vld [vmem:[%s253 + $0x34] sm:$0xf]
        %v308 = vld [vmem:[%s253 + $0x38] sm:$0xf]
        %v309 = vld [vmem:[%s253 + $0x3c] sm:$0xf]
        %v310 = vld [vmem:[%s253 + $0x40] sm:$0xf]
        %v311 = vld [vmem:[%s253 + $0x44] sm:$0xf]
        %v312 = vld [vmem:[%s253 + $0x48] sm:$0xf]
        %v313 = vld [vmem:[%s253 + $0x4c] sm:$0xf]
        %v314 = vld [vmem:[%s253 + $0x50] sm:$0xf]
        %v315 = vld [vmem:[%s253 + $0x54] sm:$0xf]
        %v316 = vld [vmem:[%s253 + $0x58] sm:$0xf]
        %v317 = vld [vmem:[%s253 + $0x5c] sm:$0xf]
        %v318 = vld [vmem:[%s253 + $0x60] sm:$0xf]
        %v319 = vld [vmem:[%s253 + $0x64] sm:$0xf]
        %v320 = vld [vmem:[%s253 + $0x68] sm:$0xf]
        %v321 = vld [vmem:[%s253 + $0x6c] sm:$0xf]
        %v322 = vld [vmem:[%s253 + $0x70] sm:$0xf]
        %v323 = vld [vmem:[%s253 + $0x74] sm:$0xf]
        %v324 = vld [vmem:[%s253 + $0x78] sm:$0xf]
        %v325 = vld [vmem:[%s253 + $0x7c] sm:$0xf]
        %v358 = vunpack.c.l.b16 %v262
        %v359 = vunpack.c.h.b16 %v262
        %v360 = vunpack.c.l.b16 %v263
        %v361 = vunpack.c.h.b16 %v263
        %v362 = vunpack.c.l.b16 %v264
        %v363 = vunpack.c.h.b16 %v264
        %v364 = vunpack.c.l.b16 %v265
        %v365 = vunpack.c.h.b16 %v265
        %v366 = vunpack.c.l.b16 %v266
        %v367 = vunpack.c.h.b16 %v266
        %v368 = vunpack.c.l.b16 %v267
        %v369 = vunpack.c.h.b16 %v267
        %v370 = vunpack.c.l.b16 %v268
        %v371 = vunpack.c.h.b16 %v268
        %v372 = vunpack.c.l.b16 %v269
        %v373 = vunpack.c.h.b16 %v269
        %v374 = vunpack.c.l.b16 %v270
        %v375 = vunpack.c.h.b16 %v270
        %v376 = vunpack.c.l.b16 %v271
        %v377 = vunpack.c.h.b16 %v271
        %v378 = vunpack.c.l.b16 %v272
        %v379 = vunpack.c.h.b16 %v272
        %v380 = vunpack.c.l.b16 %v273
        %v381 = vunpack.c.h.b16 %v273
        %v382 = vunpack.c.l.b16 %v274
        %v383 = vunpack.c.h.b16 %v274
        %v384 = vunpack.c.l.b16 %v275
        %v385 = vunpack.c.h.b16 %v275
        %v386 = vunpack.c.l.b16 %v276
        %v387 = vunpack.c.h.b16 %v276
        %v388 = vunpack.c.l.b16 %v277
        %v389 = vunpack.c.h.b16 %v277
        %v390 = vunpack.c.l.b16 %v278
        %v391 = vunpack.c.h.b16 %v278
        %v392 = vunpack.c.l.b16 %v279
        %v393 = vunpack.c.h.b16 %v279
        %v394 = vunpack.c.l.b16 %v280
        %v395 = vunpack.c.h.b16 %v280
        %v396 = vunpack.c.l.b16 %v281
        %v397 = vunpack.c.h.b16 %v281
        %v398 = vunpack.c.l.b16 %v282
        %v399 = vunpack.c.h.b16 %v282
        %v400 = vunpack.c.l.b16 %v283
        %v401 = vunpack.c.h.b16 %v283
        %v402 = vunpack.c.l.b16 %v284
        %v403 = vunpack.c.h.b16 %v284
        %v404 = vunpack.c.l.b16 %v285
        %v405 = vunpack.c.h.b16 %v285
        %v406 = vunpack.c.l.b16 %v286
        %v407 = vunpack.c.h.b16 %v286
        %v408 = vunpack.c.l.b16 %v287
        %v409 = vunpack.c.h.b16 %v287
        %v410 = vunpack.c.l.b16 %v288
        %v411 = vunpack.c.h.b16 %v288
        %v412 = vunpack.c.l.b16 %v289
        %v413 = vunpack.c.h.b16 %v289
        %v414 = vunpack.c.l.b16 %v290
        %v415 = vunpack.c.h.b16 %v290
        %v416 = vunpack.c.l.b16 %v291
        %v417 = vunpack.c.h.b16 %v291
        %v418 = vunpack.c.l.b16 %v292
        %v419 = vunpack.c.h.b16 %v292
        %v420 = vunpack.c.l.b16 %v293
        %v421 = vunpack.c.h.b16 %v293
        %v422 = vpack.c.b16 %v360, %v358
        %v423 = vpack.c.b16 %v361, %v359
        %v424 = vpack.c.b16 %v364, %v362
        %v425 = vpack.c.b16 %v365, %v363
        %v426 = vpack.c.b16 %v368, %v366
        %v427 = vpack.c.b16 %v369, %v367
        %v428 = vpack.c.b16 %v372, %v370
        %v429 = vpack.c.b16 %v373, %v371
        %v430 = vpack.c.b16 %v376, %v374
        %v431 = vpack.c.b16 %v377, %v375
        %v432 = vpack.c.b16 %v380, %v378
        %v433 = vpack.c.b16 %v381, %v379
        %v434 = vpack.c.b16 %v384, %v382
        %v435 = vpack.c.b16 %v385, %v383
        %v436 = vpack.c.b16 %v388, %v386
        %v437 = vpack.c.b16 %v389, %v387
        %v438 = vpack.c.b16 %v392, %v390
        %v439 = vpack.c.b16 %v393, %v391
        %v440 = vpack.c.b16 %v396, %v394
        %v441 = vpack.c.b16 %v397, %v395
        %v442 = vpack.c.b16 %v400, %v398
        %v443 = vpack.c.b16 %v401, %v399
        %v444 = vpack.c.b16 %v404, %v402
        %v445 = vpack.c.b16 %v405, %v403
        %v446 = vpack.c.b16 %v408, %v406
        %v447 = vpack.c.b16 %v409, %v407
        %v448 = vpack.c.b16 %v412, %v410
        %v449 = vpack.c.b16 %v413, %v411
        %v450 = vpack.c.b16 %v416, %v414
        %v451 = vpack.c.b16 %v417, %v415
        %v452 = vpack.c.b16 %v420, %v418
        %v453 = vpack.c.b16 %v421, %v419
        %v518 = vunpack.c.l.b16 %v294
        %v519 = vunpack.c.l.b16 %v295
        %v520 = vunpack.c.l.b16 %v296
        %v521 = vunpack.c.l.b16 %v297
        %v522 = vunpack.c.l.b16 %v298
        %v523 = vunpack.c.l.b16 %v299
        %v524 = vunpack.c.l.b16 %v300
        %v525 = vunpack.c.l.b16 %v301
        %v526 = vunpack.c.l.b16 %v302
        %v527 = vunpack.c.l.b16 %v303
        %v528 = vunpack.c.l.b16 %v304
        %v529 = vunpack.c.l.b16 %v305
        %v530 = vunpack.c.l.b16 %v306
        %v531 = vunpack.c.l.b16 %v307
        %v532 = vunpack.c.l.b16 %v308
        %v533 = vunpack.c.l.b16 %v309
        %v534 = vunpack.c.l.b16 %v310
        %v535 = vunpack.c.l.b16 %v311
        %v536 = vunpack.c.l.b16 %v312
        %v537 = vunpack.c.l.b16 %v313
        %v538 = vunpack.c.l.b16 %v314
        %v539 = vunpack.c.l.b16 %v315
        %v540 = vunpack.c.l.b16 %v316
        %v541 = vunpack.c.l.b16 %v317
        %v542 = vunpack.c.l.b16 %v318
        %v543 = vunpack.c.l.b16 %v319
        %v544 = vunpack.c.l.b16 %v320
        %v545 = vunpack.c.l.b16 %v321
        %v546 = vunpack.c.l.b16 %v322
        %v547 = vunpack.c.l.b16 %v323
        %v548 = vunpack.c.l.b16 %v324
        %v549 = vunpack.c.l.b16 %v325
        %v550 = vpack.c.b16 %v519, %v518
        %v551 = vpack.c.b16 %v521, %v520
        %v552 = vpack.c.b16 %v523, %v522
        %v553 = vpack.c.b16 %v525, %v524
        %v554 = vpack.c.b16 %v527, %v526
        %v555 = vpack.c.b16 %v529, %v528
        %v556 = vpack.c.b16 %v531, %v530
        %v557 = vpack.c.b16 %v533, %v532
        %v558 = vpack.c.b16 %v535, %v534
        %v559 = vpack.c.b16 %v537, %v536
        %v560 = vpack.c.b16 %v539, %v538
        %v561 = vpack.c.b16 %v541, %v540
        %v562 = vpack.c.b16 %v543, %v542
        %v563 = vpack.c.b16 %v545, %v544
        %v564 = vpack.c.b16 %v547, %v546
        %v565 = vpack.c.b16 %v549, %v548
        %582 = vmatprep.subr.bf16.mxu0 0
        %583 = vmatpush1.bf16.msra.mxu0 %v557
        %584 = vmatprep.subr.bf16.mxu0 0
        %585 = vmatpush1.bf16.msra.mxu0 %v556
        %586 = vmatprep.subr.bf16.mxu0 0
        %587 = vmatpush1.bf16.msra.mxu0 %v555
        %588 = vmatprep.subr.bf16.mxu0 0
        %589 = vmatpush1.bf16.msra.mxu0 %v554
        %590 = vmatprep.subr.bf16.mxu0 0
        %591 = vmatpush1.bf16.msra.mxu0 %v553
        %592 = vmatprep.subr.bf16.mxu0 0
        %593 = vmatpush1.bf16.msra.mxu0 %v552
        %594 = vmatprep.subr.bf16.mxu0 0
        %595 = vmatpush1.bf16.msra.mxu0 %v551
        %596 = vmatprep.subr.bf16.mxu0 0
        %597 = vmatpush1.bf16.msra.mxu0 %v550
        %598 = vmatprep.subr.bf16.mxu0 0
        %599 = vmatpush2.bf16.msra.mxu0 %v565
        %600 = vmatprep.subr.bf16.mxu0 0
        %601 = vmatpush2.bf16.msra.mxu0 %v564
        %602 = vmatprep.subr.bf16.mxu0 0
        %603 = vmatpush2.bf16.msra.mxu0 %v563
        %604 = vmatprep.subr.bf16.mxu0 0
        %605 = vmatpush2.bf16.msra.mxu0 %v562
        %606 = vmatprep.subr.bf16.mxu0 0
        %607 = vmatpush2.bf16.msra.mxu0 %v561
        %608 = vmatprep.subr.bf16.mxu0 0
        %609 = vmatpush2.bf16.msra.mxu0 %v560
        %610 = vmatprep.subr.bf16.mxu0 0
        %611 = vmatpush2.bf16.msra.mxu0 %v559
        %612 = vmatprep.subr.bf16.mxu0 0
        %613 = vmatpush2.bf16.msra.mxu0 %v558
        %614 = vmatprep.mubr.bf16.mxu0 %v423
        %615 = vmatmul.mubr.bf16.gmra.mxu0 %v422
        %v616 = vpop.f32.mrf.mxu0
        %v617 = vadd.f32 0.0, %v616
        %v618 = vpop.f32.mrf.mxu0
        %v619 = vpop.f32.mrf.mxu0
        %v620 = vadd.f32 0.0, %v619
        %v621 = vpop.f32.mrf.mxu0
        %622 = vmatprep.mubr.bf16.mxu0 %v425
        %623 = vmatmul.mubr.bf16.gmra.mxu0 %v424
        %v624 = vpop.f32.mrf.mxu0
        %v625 = vadd.f32 0.0, %v624
        %v626 = vpop.f32.mrf.mxu0
        %v627 = vpop.f32.mrf.mxu0
        %v628 = vadd.f32 0.0, %v627
        %v629 = vpop.f32.mrf.mxu0
        %630 = vmatprep.mubr.bf16.mxu0 %v427
        %631 = vmatmul.mubr.bf16.gmra.mxu0 %v426
        %v632 = vpop.f32.mrf.mxu0
        %v633 = vadd.f32 0.0, %v632
        %v634 = vpop.f32.mrf.mxu0
        %v635 = vpop.f32.mrf.mxu0
        %v636 = vadd.f32 0.0, %v635
        %v637 = vpop.f32.mrf.mxu0
        %638 = vmatprep.mubr.bf16.mxu0 %v429
        %639 = vmatmul.mubr.bf16.gmra.mxu0 %v428
        %v640 = vpop.f32.mrf.mxu0
        %v641 = vadd.f32 0.0, %v640
        %v642 = vpop.f32.mrf.mxu0
        %v643 = vpop.f32.mrf.mxu0
        %v644 = vadd.f32 0.0, %v643
        %v645 = vpop.f32.mrf.mxu0
        %646 = vmatprep.mubr.bf16.mxu0 %v431
        %647 = vmatmul.mubr.bf16.gmra.mxu0 %v430
        %v648 = vpop.f32.mrf.mxu0
        %v649 = vadd.f32 0.0, %v648
        %v650 = vpop.f32.mrf.mxu0
        %v651 = vpop.f32.mrf.mxu0
        %v652 = vadd.f32 0.0, %v651
        %v653 = vpop.f32.mrf.mxu0
        %654 = vmatprep.mubr.bf16.mxu0 %v433
        %655 = vmatmul.mubr.bf16.gmra.mxu0 %v432
        %v656 = vpop.f32.mrf.mxu0
        %v657 = vadd.f32 0.0, %v656
        %v658 = vpop.f32.mrf.mxu0
        %v659 = vpop.f32.mrf.mxu0
        %v660 = vadd.f32 0.0, %v659
        %v661 = vpop.f32.mrf.mxu0
        %662 = vmatprep.mubr.bf16.mxu0 %v435
        %663 = vmatmul.mubr.bf16.gmra.mxu0 %v434
        %v664 = vpop.f32.mrf.mxu0
        %v665 = vadd.f32 0.0, %v664
        %v666 = vpop.f32.mrf.mxu0
        %v667 = vpop.f32.mrf.mxu0
        %v668 = vadd.f32 0.0, %v667
        %v669 = vpop.f32.mrf.mxu0
        %670 = vmatprep.mubr.bf16.mxu0 %v437
        %671 = vmatmul.mubr.bf16.gmra.mxu0 %v436
        %v672 = vpop.f32.mrf.mxu0
        %v673 = vadd.f32 0.0, %v672
        %v674 = vpop.f32.mrf.mxu0
        %v675 = vpop.f32.mrf.mxu0
        %v676 = vadd.f32 0.0, %v675
        %v677 = vpop.f32.mrf.mxu0
        %678 = vmatprep.mubr.bf16.mxu0 %v439
        %679 = vmatmul.mubr.bf16.gmra.mxu0 %v438
        %v680 = vpop.f32.mrf.mxu0
        %v681 = vadd.f32 0.0, %v680
        %v682 = vpop.f32.mrf.mxu0
        %v683 = vpop.f32.mrf.mxu0
        %v684 = vadd.f32 0.0, %v683
        %v685 = vpop.f32.mrf.mxu0
        %686 = vmatprep.mubr.bf16.mxu0 %v441
        %687 = vmatmul.mubr.bf16.gmra.mxu0 %v440
        %v688 = vpop.f32.mrf.mxu0
        %v689 = vadd.f32 0.0, %v688
        %v690 = vpop.f32.mrf.mxu0
        %v691 = vpop.f32.mrf.mxu0
        %v692 = vadd.f32 0.0, %v691
        %v693 = vpop.f32.mrf.mxu0
        %694 = vmatprep.mubr.bf16.mxu0 %v443
        %695 = vmatmul.mubr.bf16.gmra.mxu0 %v442
        %v696 = vpop.f32.mrf.mxu0
        %v697 = vadd.f32 0.0, %v696
        %v698 = vpop.f32.mrf.mxu0
        %v699 = vpop.f32.mrf.mxu0
        %v700 = vadd.f32 0.0, %v699
        %v701 = vpop.f32.mrf.mxu0
        %702 = vmatprep.mubr.bf16.mxu0 %v445
        %703 = vmatmul.mubr.bf16.gmra.mxu0 %v444
        %v704 = vpop.f32.mrf.mxu0
        %v705 = vadd.f32 0.0, %v704
        %v706 = vpop.f32.mrf.mxu0
        %v707 = vpop.f32.mrf.mxu0
        %v708 = vadd.f32 0.0, %v707
        %v709 = vpop.f32.mrf.mxu0
        %710 = vmatprep.mubr.bf16.mxu0 %v447
        %711 = vmatmul.mubr.bf16.gmra.mxu0 %v446
        %v712 = vpop.f32.mrf.mxu0
        %v713 = vadd.f32 0.0, %v712
        %v714 = vpop.f32.mrf.mxu0
        %v715 = vpop.f32.mrf.mxu0
        %v716 = vadd.f32 0.0, %v715
        %v717 = vpop.f32.mrf.mxu0
        %718 = vmatprep.mubr.bf16.mxu0 %v449
        %719 = vmatmul.mubr.bf16.gmra.mxu0 %v448
        %v720 = vpop.f32.mrf.mxu0
        %v721 = vadd.f32 0.0, %v720
        %v722 = vpop.f32.mrf.mxu0
        %v723 = vpop.f32.mrf.mxu0
        %v724 = vadd.f32 0.0, %v723
        %v725 = vpop.f32.mrf.mxu0
        %726 = vmatprep.mubr.bf16.mxu0 %v451
        %727 = vmatmul.mubr.bf16.gmra.mxu0 %v450
        %v728 = vpop.f32.mrf.mxu0
        %v729 = vadd.f32 0.0, %v728
        %v730 = vpop.f32.mrf.mxu0
        %v731 = vpop.f32.mrf.mxu0
        %v732 = vadd.f32 0.0, %v731
        %v733 = vpop.f32.mrf.mxu0
        %734 = vmatprep.mubr.bf16.mxu0 %v453
        %735 = vmatmul.mubr.bf16.gmra.mxu0 %v452
        %v736 = vpop.f32.mrf.mxu0
        %v737 = vadd.f32 0.0, %v736
        %v738 = vpop.f32.mrf.mxu0
        %v739 = vpop.f32.mrf.mxu0
        %v740 = vadd.f32 0.0, %v739
        %v741 = vpop.f32.mrf.mxu0
        %742 = vdwg.mxu0
        %v743 = vld [vmem:[%s256] sm:$0x1]
        %v745 = vlaneseq
        %v746 = vshrl.u32 %v745, 7
        %v747 = vsub.s32 0, %v746
        %v748 = vrot.slane %v743, %v747
        %v750 = vmul.f32 %v617, %v748
        %v751 = vmul.f32 %v620, %v748
        %v752 = vmul.f32 %v625, %v748
        %v753 = vmul.f32 %v628, %v748
        %v754 = vmul.f32 %v633, %v748
        %v755 = vmul.f32 %v636, %v748
        %v756 = vmul.f32 %v641, %v748
        %v757 = vmul.f32 %v644, %v748
        %v758 = vmul.f32 %v649, %v748
        %v759 = vmul.f32 %v652, %v748
        %v760 = vmul.f32 %v657, %v748
        %v761 = vmul.f32 %v660, %v748
        %v762 = vmul.f32 %v665, %v748
        %v763 = vmul.f32 %v668, %v748
        %v764 = vmul.f32 %v673, %v748
        %v765 = vmul.f32 %v676, %v748
        %v766 = vmul.f32 %v681, %v748
        %v767 = vmul.f32 %v684, %v748
        %v768 = vmul.f32 %v689, %v748
        %v769 = vmul.f32 %v692, %v748
        %v770 = vmul.f32 %v697, %v748
        %v771 = vmul.f32 %v700, %v748
        %v772 = vmul.f32 %v705, %v748
        %v773 = vmul.f32 %v708, %v748
        %v774 = vmul.f32 %v713, %v748
        %v775 = vmul.f32 %v716, %v748
        %v776 = vmul.f32 %v721, %v748
        %v777 = vmul.f32 %v724, %v748
        %v778 = vmul.f32 %v729, %v748
        %v779 = vmul.f32 %v732, %v748
        %v780 = vmul.f32 %v737, %v748
        %v781 = vmul.f32 %v740, %v748
        %v782 = vld [vmem:[%s259] sm:$0x1]
        %v784 = vlaneseq
        %v785 = vshrl.u32 %v784, 7
        %v786 = vsub.s32 0, %v785
        %v787 = vrot.slane %v782, %v786
        %v789 = vadd.f32 %v750, %v787
        %v790 = vadd.f32 %v751, %v787
        %v791 = vadd.f32 %v752, %v787
        %v792 = vadd.f32 %v753, %v787
        %v793 = vadd.f32 %v754, %v787
        %v794 = vadd.f32 %v755, %v787
        %v795 = vadd.f32 %v756, %v787
        %v796 = vadd.f32 %v757, %v787
        %v797 = vadd.f32 %v758, %v787
        %v798 = vadd.f32 %v759, %v787
        %v799 = vadd.f32 %v760, %v787
        %v800 = vadd.f32 %v761, %v787
        %v801 = vadd.f32 %v762, %v787
        %v802 = vadd.f32 %v763, %v787
        %v803 = vadd.f32 %v764, %v787
        %v804 = vadd.f32 %v765, %v787
        %v805 = vadd.f32 %v766, %v787
        %v806 = vadd.f32 %v767, %v787
        %v807 = vadd.f32 %v768, %v787
        %v808 = vadd.f32 %v769, %v787
        %v809 = vadd.f32 %v770, %v787
        %v810 = vadd.f32 %v771, %v787
        %v811 = vadd.f32 %v772, %v787
        %v812 = vadd.f32 %v773, %v787
        %v813 = vadd.f32 %v774, %v787
        %v814 = vadd.f32 %v775, %v787
        %v815 = vadd.f32 %v776, %v787
        %v816 = vadd.f32 %v777, %v787
        %v817 = vadd.f32 %v778, %v787
        %v818 = vadd.f32 %v779, %v787
        %v819 = vadd.f32 %v780, %v787
        %v820 = vadd.f32 %v781, %v787
        %v821 = vmax.f32 %v789, 0.0
        %v822 = vmax.f32 %v790, 0.0
        %v823 = vmax.f32 %v791, 0.0
        %v824 = vmax.f32 %v792, 0.0
        %v825 = vmax.f32 %v793, 0.0
        %v826 = vmax.f32 %v794, 0.0
        %v827 = vmax.f32 %v795, 0.0
        %v828 = vmax.f32 %v796, 0.0
        %v829 = vmax.f32 %v797, 0.0
        %v830 = vmax.f32 %v798, 0.0
        %v831 = vmax.f32 %v799, 0.0
        %v832 = vmax.f32 %v800, 0.0
        %v833 = vmax.f32 %v801, 0.0
        %v834 = vmax.f32 %v802, 0.0
        %v835 = vmax.f32 %v803, 0.0
        %v836 = vmax.f32 %v804, 0.0
        %v837 = vmax.f32 %v805, 0.0
        %v838 = vmax.f32 %v806, 0.0
        %v839 = vmax.f32 %v807, 0.0
        %v840 = vmax.f32 %v808, 0.0
        %v841 = vmax.f32 %v809, 0.0
        %v842 = vmax.f32 %v810, 0.0
        %v843 = vmax.f32 %v811, 0.0
        %v844 = vmax.f32 %v812, 0.0
        %v845 = vmax.f32 %v813, 0.0
        %v846 = vmax.f32 %v814, 0.0
        %v847 = vmax.f32 %v815, 0.0
        %v848 = vmax.f32 %v816, 0.0
        %v849 = vmax.f32 %v817, 0.0
        %v850 = vmax.f32 %v818, 0.0
        %v851 = vmax.f32 %v819, 0.0
        %v852 = vmax.f32 %v820, 0.0
        %v853 = vpack.c.bf16 %v822, %v821
        %v854 = vpack.c.bf16 %v824, %v823
        %v855 = vpack.c.bf16 %v826, %v825
        %v856 = vpack.c.bf16 %v828, %v827
        %v857 = vpack.c.bf16 %v830, %v829
        %v858 = vpack.c.bf16 %v832, %v831
        %v859 = vpack.c.bf16 %v834, %v833
        %v860 = vpack.c.bf16 %v836, %v835
        %v861 = vpack.c.bf16 %v838, %v837
        %v862 = vpack.c.bf16 %v840, %v839
        %v863 = vpack.c.bf16 %v842, %v841
        %v864 = vpack.c.bf16 %v844, %v843
        %v865 = vpack.c.bf16 %v846, %v845
        %v866 = vpack.c.bf16 %v848, %v847
        %v867 = vpack.c.bf16 %v850, %v849
        %v868 = vpack.c.bf16 %v852, %v851
        %v885 = vunpack.c.l.b16 %v853
        %v886 = vunpack.c.h.b16 %v853
        %v887 = vunpack.c.l.b16 %v854
        %v888 = vunpack.c.h.b16 %v854
        %v889 = vunpack.c.l.b16 %v855
        %v890 = vunpack.c.h.b16 %v855
        %v891 = vunpack.c.l.b16 %v856
        %v892 = vunpack.c.h.b16 %v856
        %v893 = vunpack.c.l.b16 %v857
        %v894 = vunpack.c.h.b16 %v857
        %v895 = vunpack.c.l.b16 %v858
        %v896 = vunpack.c.h.b16 %v858
        %v897 = vunpack.c.l.b16 %v859
        %v898 = vunpack.c.h.b16 %v859
        %v899 = vunpack.c.l.b16 %v860
        %v900 = vunpack.c.h.b16 %v860
        %v901 = vunpack.c.l.b16 %v861
        %v902 = vunpack.c.h.b16 %v861
        %v903 = vunpack.c.l.b16 %v862
        %v904 = vunpack.c.h.b16 %v862
        %v905 = vunpack.c.l.b16 %v863
        %v906 = vunpack.c.h.b16 %v863
        %v907 = vunpack.c.l.b16 %v864
        %v908 = vunpack.c.h.b16 %v864
        %v909 = vunpack.c.l.b16 %v865
        %v910 = vunpack.c.h.b16 %v865
        %v911 = vunpack.c.l.b16 %v866
        %v912 = vunpack.c.h.b16 %v866
        %v913 = vunpack.c.l.b16 %v867
        %v914 = vunpack.c.h.b16 %v867
        %v915 = vunpack.c.l.b16 %v868
        %v916 = vunpack.c.h.b16 %v868
        %v917 = vpack.c.b16 %v885, %v885
        %v918 = vpack.c.b16 %v886, %v886
        %v919 = vpack.c.b16 %v887, %v887
        %v920 = vpack.c.b16 %v888, %v888
        %v921 = vpack.c.b16 %v889, %v889
        %v922 = vpack.c.b16 %v890, %v890
        %v923 = vpack.c.b16 %v891, %v891
        %v924 = vpack.c.b16 %v892, %v892
        %v925 = vpack.c.b16 %v893, %v893
        %v926 = vpack.c.b16 %v894, %v894
        %v927 = vpack.c.b16 %v895, %v895
        %v928 = vpack.c.b16 %v896, %v896
        %v929 = vpack.c.b16 %v897, %v897
        %v930 = vpack.c.b16 %v898, %v898
        %v931 = vpack.c.b16 %v899, %v899
        %v932 = vpack.c.b16 %v900, %v900
        %v933 = vpack.c.b16 %v901, %v901
        %v934 = vpack.c.b16 %v902, %v902
        %v935 = vpack.c.b16 %v903, %v903
        %v936 = vpack.c.b16 %v904, %v904
        %v937 = vpack.c.b16 %v905, %v905
        %v938 = vpack.c.b16 %v906, %v906
        %v939 = vpack.c.b16 %v907, %v907
        %v940 = vpack.c.b16 %v908, %v908
        %v941 = vpack.c.b16 %v909, %v909
        %v942 = vpack.c.b16 %v910, %v910
        %v943 = vpack.c.b16 %v911, %v911
        %v944 = vpack.c.b16 %v912, %v912
        %v945 = vpack.c.b16 %v913, %v913
        %v946 = vpack.c.b16 %v914, %v914
        %v947 = vpack.c.b16 %v915, %v915
        %v948 = vpack.c.b16 %v916, %v916
        %vm981 = vcmask 519168
        %982 = vst.msk [vmem:[%s242] sm:$0xf] %vm981, %v917
        %983 = vst.msk [vmem:[%s242 + $0x4] sm:$0xf] %vm981, %v918
        %984 = vst.msk [vmem:[%s242 + $0x8] sm:$0xf] %vm981, %v919
        %985 = vst.msk [vmem:[%s242 + $0xc] sm:$0xf] %vm981, %v920
        %986 = vst.msk [vmem:[%s242 + $0x10] sm:$0xf] %vm981, %v921
        %987 = vst.msk [vmem:[%s242 + $0x14] sm:$0xf] %vm981, %v922
        %988 = vst.msk [vmem:[%s242 + $0x18] sm:$0xf] %vm981, %v923
        %989 = vst.msk [vmem:[%s242 + $0x1c] sm:$0xf] %vm981, %v924
        %990 = vst.msk [vmem:[%s242 + $0x20] sm:$0xf] %vm981, %v925
        %991 = vst.msk [vmem:[%s242 + $0x24] sm:$0xf] %vm981, %v926
        %992 = vst.msk [vmem:[%s242 + $0x28] sm:$0xf] %vm981, %v927
        %993 = vst.msk [vmem:[%s242 + $0x2c] sm:$0xf] %vm981, %v928
        %994 = vst.msk [vmem:[%s242 + $0x30] sm:$0xf] %vm981, %v929
        %995 = vst.msk [vmem:[%s242 + $0x34] sm:$0xf] %vm981, %v930
        %996 = vst.msk [vmem:[%s242 + $0x38] sm:$0xf] %vm981, %v931
        %997 = vst.msk [vmem:[%s242 + $0x3c] sm:$0xf] %vm981, %v932
        %998 = vst.msk [vmem:[%s242 + $0x40] sm:$0xf] %vm981, %v933
        %999 = vst.msk [vmem:[%s242 + $0x44] sm:$0xf] %vm981, %v934
        %1000 = vst.msk [vmem:[%s242 + $0x48] sm:$0xf] %vm981, %v935
        %1001 = vst.msk [vmem:[%s242 + $0x4c] sm:$0xf] %vm981, %v936
        %1002 = vst.msk [vmem:[%s242 + $0x50] sm:$0xf] %vm981, %v937
        %1003 = vst.msk [vmem:[%s242 + $0x54] sm:$0xf] %vm981, %v938
        %1004 = vst.msk [vmem:[%s242 + $0x58] sm:$0xf] %vm981, %v939
        %1005 = vst.msk [vmem:[%s242 + $0x5c] sm:$0xf] %vm981, %v940
        %1006 = vst.msk [vmem:[%s242 + $0x60] sm:$0xf] %vm981, %v941
        %1007 = vst.msk [vmem:[%s242 + $0x64] sm:$0xf] %vm981, %v942
        %1008 = vst.msk [vmem:[%s242 + $0x68] sm:$0xf] %vm981, %v943
        %1009 = vst.msk [vmem:[%s242 + $0x6c] sm:$0xf] %vm981, %v944
        %1010 = vst.msk [vmem:[%s242 + $0x70] sm:$0xf] %vm981, %v945
        %1011 = vst.msk [vmem:[%s242 + $0x74] sm:$0xf] %vm981, %v946
        %1012 = vst.msk [vmem:[%s242 + $0x78] sm:$0xf] %vm981, %v947
        %1013 = vst.msk [vmem:[%s242 + $0x7c] sm:$0xf] %vm981, %v948
        %s1014 = sand.u32 %s144, 1
        %s1015 = scalar_lea.sflag [#allocation3], %s1014
        %s1016 = sand.u32 %s144, 1
        %s1017 = smul.addr %s1016, 128
        %s1018 = scalar_lea.vmem [#allocation2], %s1017
        // Predicated region
        $region37: #{conv2d_fused.1} parent=35 // pred_check
          %p1019 = pneg %p154
        $region38: #{conv2d_fused.1} parent=35 // pred_check_branch
          %1021 = sbr.rel (%p1019) target = $region40
        $region39: #{conv2d_fused.1} parent=35 // pred_region
          %s1022 = smul.u32 32, %s22
          %s1024 = ssub.s32 2048, 2048
          %1025 = vsyncadd %s1015, %s1024
          %s1026 = sadd.s32 %s23, %s1022
          %s1027 = smul.addr %s1026, 64
          %s1028 = scalar_lea.hbm %s4, %s1027
          %s1029 = sshll.u32 %s1018, 4
          %s1030 = int_to_ptr.vmem [resolvable:$true] %s1029
          %1035 = dma.vmem_to_hbm [thread:$0]  %s1030, 2048, %s1028, %s1015, 64, 64, 4
        $region40: #{conv2d_fused.1} parent=35 // pred_fallthru
          _
      $region36: #{conv2d_fused.1} parent=5 // pred_fallthru
        _
      %p1036 = scmp.le.s32.totalorder 2, %s13
      // Predicated region
      $region41: #{conv2d_fused.1} parent=5 // pred_check
        %p1037 = pneg %p1036
      $region42: #{conv2d_fused.1} parent=5 // pred_check_branch
        %1039 = sbr.rel (%p1037) target = $region44
      $region43: #{conv2d_fused.1} parent=5 // pred_region
        %s1040 = ssub.s32 %s13, 2
        // Predicated region
        $region45: #{conv2d_fused.1} parent=43 // pred_check
          %p1041 = pneg %p160
        $region46: #{conv2d_fused.1} parent=43 // pred_check_branch
          %1043 = sbr.rel (%p1041) target = $region48
        $region47: #{conv2d_fused.1} parent=43 // pred_region
          %s1044 = sand.u32 %s145, 1
          %s1045 = scalar_lea.sflag [#allocation3], %s1044
          %s1046 = sand.u32 %s145, 1
          %s1047 = smul.addr %s1046, 128
          %s1048 = scalar_lea.vmem [#allocation2], %s1047
          %1049 = dma.done %s1045, 2048
        $region48: #{conv2d_fused.1} parent=43 // pred_fallthru
          _
      $region44: #{conv2d_fused.1} parent=5 // pred_fallthru
        _
    $region6: #{conv2d_fused.1} parent=1 // loop_footer
      %s17 = sadd.s32 1, %s13
    $region7: #{conv2d_fused.1} parent=1 // loop_footer_branch
      %12 = sbr.rel target = $region3
    $region8: #{conv2d_fused.1} parent=1 // loop_exit
      _
    %1050 = vsyncpa [#allocation3], 1
    %s1051 = scalar_lea.sflag [#allocation3], 1
    %1052 = vsyncpa %s1051, 1

</llo_original>
